<compile_context>
chip_gen: v7x
topology: tpu7x:2x2x1
jax: 0.10.0
libtpu: 0.0.40
codegen_flags: <defaults>
</compile_context>

<pallas_src>
import math
from functools import partial

import jax
import jax.numpy as jnp
from jax import lax
from jax.experimental import pallas as pl
from jax.experimental.pallas import tpu as pltpu


def _conv_out(size, k, s):
    return (size - k) // s + 1


# ---------------------------------------------------------------------------
# Setup-time preparation (pure JAX, run once outside the jitted forward).
# ---------------------------------------------------------------------------
def _banded_weights(weight, stride, in_width, scale=1.0):
    """WB[kh, w*Cin+ci, wo*Cout+co] = scale * weight[co, ci, kh, w - wo*stride]
    (zero where w - wo*stride falls outside [0, KW))."""
    c_out, c_in, kh_sz, kw_sz = weight.shape
    out_width = _conv_out(in_width, kw_sz, stride)
    x_idx = jnp.arange(in_width)[None, :, None]            # input column  w
    k_idx = jnp.arange(kw_sz)[:, None, None]                # kernel column kw
    o_idx = jnp.arange(out_width)[None, None, :]            # output column wo
    placement = (x_idx == o_idx * stride + k_idx).astype(jnp.float32)  # (KW, Win, Wout)
    # wb[h, x, c, v, o] = sum_k weight[o, c, h, k] * placement[k, x, v]
    wb = jnp.einsum('ochk,kxv->hxcvo', weight.astype(jnp.float32), placement)
    return (scale * wb).reshape(kh_sz, in_width * c_in, out_width * c_out)


def prepare_conv(params, input_size):
    """params: [(weight (Cout,Cin,KH,KW), bias (Cout,), stride), ...]
    input_size: (C, H, W).  Returns everything the fused kernel needs."""
    c, h, w = input_size
    wbs, biases, geoms = [], [], []
    for li, (wt, b, s) in enumerate(params):
        c_out, c_in, kh_sz, kw_sz = wt.shape
        assert c_in == c
        h_out = _conv_out(h, kh_sz, s)
        w_out = _conv_out(w, kw_sz, s)
        scale = (1.0 / 255.0) if li == 0 else 1.0           # fold x/255 into layer-1 W
        wbs.append(_banded_weights(wt, s, w, scale=scale))
        # bias tiled over output columns: b_full[wo*Cout + co] = b[co]
        biases.append(jnp.tile(b.astype(jnp.float32), w_out).reshape(1, w_out * c_out))
        geoms.append((h, w * c, kh_sz, s, h_out, w_out * c_out))
        c, h, w = c_out, h_out, w_out
    return dict(wbs=wbs, biases=biases, geoms=tuple(geoms),
                in_hwc=(input_size[1], input_size[2], input_size[0]),
                out_hwc=(h, w, c))


# ---------------------------------------------------------------------------
# Fused Pallas kernel: one grid step == one batch element, whole conv stack.
# Refs: x, (wb_0, b_0), ..., (wb_{L-1}, b_{L-1}), out.
# ---------------------------------------------------------------------------
def _make_fused_kernel(geoms):
    n_layers = len(geoms)

    def kernel(*refs):
        x_ref = refs[0]
        o_ref = refs[1 + 2 * n_layers]
        act = x_ref[0]                                      # (H_in, W_in*C_in) f32
        for li, (h_in, wc_in, kh_sz, stride, h_out, wc_out) in enumerate(geoms):
            wb_ref = refs[1 + 2 * li]                       # (KH, W_in*C_in, W_out*C_out)
            b_ref = refs[2 + 2 * li]                        # (1, W_out*C_out)
            acc = jnp.zeros((h_out, wc_out), jnp.float32)
            for kh in range(kh_sz):
                # 0/1 row-selection matrix: output row ho picks input row ho*S+kh.
                col = lax.broadcasted_iota(jnp.int32, (h_out, h_in), 1)
                row = lax.broadcasted_iota(jnp.int32, (h_out, h_in), 0)
                sel = (col == row * stride + kh).astype(jnp.float32)
                rows = jnp.dot(sel, act, preferred_element_type=jnp.float32)      # (Hout, Win*Cin)
                acc = acc + jnp.dot(rows, wb_ref[kh],
                                    preferred_element_type=jnp.float32)            # (Hout, Wout*Cout)
            act = jnp.maximum(acc + b_ref[...], 0.0)        # bias + ReLU, stays on-chip
        o_ref[...] = act.reshape((1,) + act.shape)

    return kernel


def conv_forward_fused(x_nchw, prepared):
    """Full module forward.  x_nchw: (N, C, H, W) int/float.  Returns (N, C_L*H_L*W_L) f32."""
    wbs, biases, geoms = prepared["wbs"], prepared["biases"], prepared["geoms"]
    h0, w0, c0 = prepared["in_hwc"]
    h_l, w_l, c_l = prepared["out_hwc"]
    n = x_nchw.shape[0]

    # NCHW -> (N, H, W*C) channel-minor rows: the only pre-kernel layout op
    # (a few KB).  f32 is exact for 0..255 pixel values.
    x_rows = jnp.transpose(x_nchw.astype(jnp.float32), (0, 2, 3, 1)).reshape(n, h0, w0 * c0)

    in_specs = [pl.BlockSpec((1, h0, w0 * c0), lambda b: (b, 0, 0))]   # per-batch image
    args = [x_rows]
    for wb, bias in zip(wbs, biases):
        in_specs.append(pl.BlockSpec(wb.shape, lambda b: (0, 0, 0)))   # VMEM-resident weights
        in_specs.append(pl.BlockSpec(bias.shape, lambda b: (0, 0)))    # VMEM-resident bias
        args.extend([wb, bias])

    flops = 0
    for h_in, wc_in, kh_sz, _s, h_out, wc_out in geoms:
        flops += kh_sz * (2 * h_out * h_in * wc_in + 2 * h_out * wc_in * wc_out)
    flops *= n
    bytes_accessed = 4 * (int(x_rows.size)
                          + sum(int(w.size) for w in wbs)
                          + sum(int(b.size) for b in biases)
                          + n * h_l * w_l * c_l)

    out = pl.pallas_call(
        _make_fused_kernel(geoms),
        out_shape=jax.ShapeDtypeStruct((n, h_l, w_l * c_l), jnp.float32),
        grid=(n,),                                          # >= 2 steps -> both v7x cores
        in_specs=in_specs,
        out_specs=pl.BlockSpec((1, h_l, w_l * c_l), lambda b: (b, 0, 0)),
        compiler_params=pltpu.CompilerParams(dimension_semantics=("parallel",)),
        cost_estimate=pl.CostEstimate(flops=int(flops), transcendentals=0,
                                      bytes_accessed=int(bytes_accessed)),
    )(*args)

    # Tiny post-kernel layout op: (N, H_L, W_L*C_L) -> NCHW-ordered flatten,
    # matching torch's Flatten over (C, H, W).
    return out.reshape(n, h_l, w_l, c_l).transpose(0, 3, 1, 2).reshape(n, -1)


# ---------------------------------------------------------------------------
# Pure-JAX reference (same module semantics) for a correctness cross-check.
# ---------------------------------------------------------------------------
def conv_forward_reference(x_nchw, params):
    h = x_nchw.astype(jnp.float32) / 255.0
    for wt, b, s in params:
        h = lax.conv_general_dilated(h, wt, window_strides=(s, s), padding='VALID',
                                     dimension_numbers=('NCHW', 'OIHW', 'NCHW'))
        h = jnp.maximum(h + b.reshape(1, -1, 1, 1), 0.0)
    return h.reshape(h.shape[0], -1)


# ---------------------------------------------------------------------------
# Parameter construction (deterministic orthogonal init, torch-style layout).
# ---------------------------------------------------------------------------
def ortho_init(key, shape, gain):
    rows = shape[0]
    cols = int(math.prod(shape[1:]))
    flat = jax.random.normal(key, (max(rows, cols), min(rows, cols)), jnp.float32)
    q, r = jnp.linalg.qr(flat)
    q = q * jnp.sign(jnp.diag(r))                           # make decomposition unique
    if rows < cols:
        q = q.T
    return (gain * q[:rows, :cols]).reshape(shape)


def build_params(key, input_size, channels, kernels, strides):
    params = []
    in_ch = input_size[0]
    keys = jax.random.split(key, 2 * len(channels))
    for i, (c, k, s) in enumerate(zip(channels, kernels, strides)):
        wt = ortho_init(keys[2 * i], (c, in_ch, k, k), gain=math.sqrt(2.0))
        # small non-zero bias so the bias-add path is actually exercised
        b = 0.01 * jax.random.normal(keys[2 * i + 1], (c,), jnp.float32)
        params.append((wt, b, s))
        in_ch = c
    return params


if __name__ == "__main__":
    # Module config: input_size=(4,16,16), channels=[8,16], kernel=[3,3], stride=[2,2]
    input_size = (4, 16, 16)
    channels = [8, 16]
    kernels = [3, 3]
    strides = [2, 2]

    key = jax.random.PRNGKey(0)
    kx, kp = jax.random.split(key)

    # synthetic "uint8 image" batch (integer values 0..255), batch=2
    x = jax.random.randint(kx, (2,) + input_size, 0, 256, dtype=jnp.int32)

    params = build_params(kp, input_size, channels, kernels, strides)
    prepared = prepare_conv(params, input_size)

    fwd = jax.jit(partial(conv_forward_fused, prepared=prepared))
    out = jax.block_until_ready(fwd(x))

    ref = jax.block_until_ready(jax.jit(partial(conv_forward_reference, params=params))(x))

    # spatial: 16 -(k3,s2)-> 7 -(k3,s2)-> 3  =>  output_size = 16*3*3 = 144
    assert out.shape == (2, channels[-1] * 3 * 3), out.shape
    assert out.dtype == jnp.float32
    assert bool(jnp.all(out >= 0.0))                        # ReLU output
    max_err = float(jnp.max(jnp.abs(out - ref)))
    assert max_err < 1e-3, f"mismatch vs reference conv: max abs err = {max_err}"

    print("KERNEL_OK")
</pallas_src>

<mosaic_0001>
module attributes {stable_mosaic.version = 11 : i64} {
  func.func @kernel(%arg0: i32, %arg1: memref<1x16x64xf32, #tpu.memory_space<vmem>>, %arg2: memref<3x64x56xf32, #tpu.memory_space<vmem>>, %arg3: memref<1x56xf32, #tpu.memory_space<vmem>>, %arg4: memref<3x56x48xf32, #tpu.memory_space<vmem>>, %arg5: memref<1x48xf32, #tpu.memory_space<vmem>>, %arg6: memref<1x3x48xf32, #tpu.memory_space<vmem>>) attributes {dimension_semantics = [#tpu.dimension_semantics<parallel>], iteration_bounds = array<i64: 2>, scalar_prefetch = 0 : i64, scratch_operands = 0 : i64, tpu.core_type = #tpu.core_type<tc>, window_params = [{transform_indices = @transform_0, window_bounds = array<i64: 1, 16, 64>}, {pipeline_mode = #tpu.pipeline_mode<synchronous>, transform_indices = @transform_1, window_bounds = array<i64: 3, 64, 56>}, {pipeline_mode = #tpu.pipeline_mode<synchronous>, transform_indices = @transform_2, window_bounds = array<i64: 1, 56>}, {pipeline_mode = #tpu.pipeline_mode<synchronous>, transform_indices = @transform_3, window_bounds = array<i64: 3, 56, 48>}, {pipeline_mode = #tpu.pipeline_mode<synchronous>, transform_indices = @transform_4, window_bounds = array<i64: 1, 48>}, {transform_indices = @transform_5, window_bounds = array<i64: 1, 3, 48>}]} {
    %c0 = arith.constant 0 : index
    %c0_0 = arith.constant 0 : index
    %c0_1 = arith.constant 0 : index
    %0 = vector.load %arg1[%c0, %c0_0, %c0_1] : memref<1x16x64xf32, #tpu.memory_space<vmem>>, vector<1x16x64xf32>
    %1 = vector.shape_cast %0 : vector<1x16x64xf32> to vector<16x64xf32>
    %cst = arith.constant 0.000000e+00 : f32
    %2 = vector.broadcast %cst : f32 to vector<7x56xf32>
    %3 = tpu.iota {dimensions = array<i32: 1>} : vector<7x16xi32>
    %4 = tpu.iota {dimensions = array<i32: 0>} : vector<7x16xi32>
    %c2_i32 = arith.constant 2 : i32
    %5 = vector.broadcast %c2_i32 : i32 to vector<7x16xi32>
    %6 = arith.muli %4, %5 : vector<7x16xi32>
    %c0_i32 = arith.constant 0 : i32
    %7 = vector.broadcast %c0_i32 : i32 to vector<7x16xi32>
    %8 = arith.addi %6, %7 : vector<7x16xi32>
    %9 = arith.cmpi eq, %3, %8 : vector<7x16xi32>
    %10 = arith.extui %9 : vector<7x16xi1> to vector<7x16xi32>
    %11 = arith.sitofp %10 : vector<7x16xi32> to vector<7x16xf32>
    %cst_2 = arith.constant dense<0.000000e+00> : vector<7x64xf32>
    %12 = tpu.matmul %11, %1, %cst_2 {dimension_numbers = #tpu.dot_dimension_numbers<[1], [0], [0], [1], [0, 0, 1, 1], [], []>} : vector<7x16xf32>, vector<16x64xf32>, vector<7x64xf32> -> vector<7x64xf32>
    %c0_3 = arith.constant 0 : index
    %c0_4 = arith.constant 0 : index
    %c0_5 = arith.constant 0 : index
    %13 = vector.load %arg2[%c0_3, %c0_4, %c0_5] : memref<3x64x56xf32, #tpu.memory_space<vmem>>, vector<1x64x56xf32>
    %14 = vector.shape_cast %13 : vector<1x64x56xf32> to vector<64x56xf32>
    %cst_6 = arith.constant dense<0.000000e+00> : vector<7x56xf32>
    %15 = tpu.matmul %12, %14, %cst_6 {dimension_numbers = #tpu.dot_dimension_numbers<[1], [0], [0], [1], [0, 0, 1, 1], [], []>} : vector<7x64xf32>, vector<64x56xf32>, vector<7x56xf32> -> vector<7x56xf32>
    %16 = arith.addf %2, %15 : vector<7x56xf32>
    %17 = tpu.iota {dimensions = array<i32: 1>} : vector<7x16xi32>
    %18 = tpu.iota {dimensions = array<i32: 0>} : vector<7x16xi32>
    %c2_i32_7 = arith.constant 2 : i32
    %19 = vector.broadcast %c2_i32_7 : i32 to vector<7x16xi32>
    %20 = arith.muli %18, %19 : vector<7x16xi32>
    %c1_i32 = arith.constant 1 : i32
    %21 = vector.broadcast %c1_i32 : i32 to vector<7x16xi32>
    %22 = arith.addi %20, %21 : vector<7x16xi32>
    %23 = arith.cmpi eq, %17, %22 : vector<7x16xi32>
    %24 = arith.extui %23 : vector<7x16xi1> to vector<7x16xi32>
    %25 = arith.sitofp %24 : vector<7x16xi32> to vector<7x16xf32>
    %cst_8 = arith.constant dense<0.000000e+00> : vector<7x64xf32>
    %26 = tpu.matmul %25, %1, %cst_8 {dimension_numbers = #tpu.dot_dimension_numbers<[1], [0], [0], [1], [0, 0, 1, 1], [], []>} : vector<7x16xf32>, vector<16x64xf32>, vector<7x64xf32> -> vector<7x64xf32>
    %c1 = arith.constant 1 : index
    %c0_9 = arith.constant 0 : index
    %c0_10 = arith.constant 0 : index
    %27 = vector.load %arg2[%c1, %c0_9, %c0_10] : memref<3x64x56xf32, #tpu.memory_space<vmem>>, vector<1x64x56xf32>
    %28 = vector.shape_cast %27 : vector<1x64x56xf32> to vector<64x56xf32>
    %cst_11 = arith.constant dense<0.000000e+00> : vector<7x56xf32>
    %29 = tpu.matmul %26, %28, %cst_11 {dimension_numbers = #tpu.dot_dimension_numbers<[1], [0], [0], [1], [0, 0, 1, 1], [], []>} : vector<7x64xf32>, vector<64x56xf32>, vector<7x56xf32> -> vector<7x56xf32>
    %30 = arith.addf %16, %29 : vector<7x56xf32>
    %31 = tpu.iota {dimensions = array<i32: 1>} : vector<7x16xi32>
    %32 = tpu.iota {dimensions = array<i32: 0>} : vector<7x16xi32>
    %c2_i32_12 = arith.constant 2 : i32
    %33 = vector.broadcast %c2_i32_12 : i32 to vector<7x16xi32>
    %34 = arith.muli %32, %33 : vector<7x16xi32>
    %c2_i32_13 = arith.constant 2 : i32
    %35 = vector.broadcast %c2_i32_13 : i32 to vector<7x16xi32>
    %36 = arith.addi %34, %35 : vector<7x16xi32>
    %37 = arith.cmpi eq, %31, %36 : vector<7x16xi32>
    %38 = arith.extui %37 : vector<7x16xi1> to vector<7x16xi32>
    %39 = arith.sitofp %38 : vector<7x16xi32> to vector<7x16xf32>
    %cst_14 = arith.constant dense<0.000000e+00> : vector<7x64xf32>
    %40 = tpu.matmul %39, %1, %cst_14 {dimension_numbers = #tpu.dot_dimension_numbers<[1], [0], [0], [1], [0, 0, 1, 1], [], []>} : vector<7x16xf32>, vector<16x64xf32>, vector<7x64xf32> -> vector<7x64xf32>
    %c2 = arith.constant 2 : index
    %c0_15 = arith.constant 0 : index
    %c0_16 = arith.constant 0 : index
    %41 = vector.load %arg2[%c2, %c0_15, %c0_16] : memref<3x64x56xf32, #tpu.memory_space<vmem>>, vector<1x64x56xf32>
    %42 = vector.shape_cast %41 : vector<1x64x56xf32> to vector<64x56xf32>
    %cst_17 = arith.constant dense<0.000000e+00> : vector<7x56xf32>
    %43 = tpu.matmul %40, %42, %cst_17 {dimension_numbers = #tpu.dot_dimension_numbers<[1], [0], [0], [1], [0, 0, 1, 1], [], []>} : vector<7x64xf32>, vector<64x56xf32>, vector<7x56xf32> -> vector<7x56xf32>
    %44 = arith.addf %30, %43 : vector<7x56xf32>
    %c0_18 = arith.constant 0 : index
    %c0_19 = arith.constant 0 : index
    %45 = vector.load %arg3[%c0_18, %c0_19] : memref<1x56xf32, #tpu.memory_space<vmem>>, vector<1x56xf32>
    %46 = vector.broadcast %45 : vector<1x56xf32> to vector<7x56xf32>
    %47 = arith.addf %44, %46 : vector<7x56xf32>
    %cst_20 = arith.constant 0.000000e+00 : f32
    %48 = vector.broadcast %cst_20 : f32 to vector<7x56xf32>
    %49 = arith.maximumf %47, %48 : vector<7x56xf32>
    %cst_21 = arith.constant 0.000000e+00 : f32
    %50 = vector.broadcast %cst_21 : f32 to vector<3x48xf32>
    %51 = tpu.iota {dimensions = array<i32: 1>} : vector<3x7xi32>
    %52 = tpu.iota {dimensions = array<i32: 0>} : vector<3x7xi32>
    %c2_i32_22 = arith.constant 2 : i32
    %53 = vector.broadcast %c2_i32_22 : i32 to vector<3x7xi32>
    %54 = arith.muli %52, %53 : vector<3x7xi32>
    %c0_i32_23 = arith.constant 0 : i32
    %55 = vector.broadcast %c0_i32_23 : i32 to vector<3x7xi32>
    %56 = arith.addi %54, %55 : vector<3x7xi32>
    %57 = arith.cmpi eq, %51, %56 : vector<3x7xi32>
    %58 = arith.extui %57 : vector<3x7xi1> to vector<3x7xi32>
    %59 = arith.sitofp %58 : vector<3x7xi32> to vector<3x7xf32>
    %cst_24 = arith.constant dense<0.000000e+00> : vector<3x56xf32>
    %60 = tpu.matmul %59, %49, %cst_24 {dimension_numbers = #tpu.dot_dimension_numbers<[1], [0], [0], [1], [0, 0, 1, 1], [], []>} : vector<3x7xf32>, vector<7x56xf32>, vector<3x56xf32> -> vector<3x56xf32>
    %c0_25 = arith.constant 0 : index
    %c0_26 = arith.constant 0 : index
    %c0_27 = arith.constant 0 : index
    %61 = vector.load %arg4[%c0_25, %c0_26, %c0_27] : memref<3x56x48xf32, #tpu.memory_space<vmem>>, vector<1x56x48xf32>
    %62 = vector.shape_cast %61 : vector<1x56x48xf32> to vector<56x48xf32>
    %cst_28 = arith.constant dense<0.000000e+00> : vector<3x48xf32>
    %63 = tpu.matmul %60, %62, %cst_28 {dimension_numbers = #tpu.dot_dimension_numbers<[1], [0], [0], [1], [0, 0, 1, 1], [], []>} : vector<3x56xf32>, vector<56x48xf32>, vector<3x48xf32> -> vector<3x48xf32>
    %64 = arith.addf %50, %63 : vector<3x48xf32>
    %65 = tpu.iota {dimensions = array<i32: 1>} : vector<3x7xi32>
    %66 = tpu.iota {dimensions = array<i32: 0>} : vector<3x7xi32>
    %c2_i32_29 = arith.constant 2 : i32
    %67 = vector.broadcast %c2_i32_29 : i32 to vector<3x7xi32>
    %68 = arith.muli %66, %67 : vector<3x7xi32>
    %c1_i32_30 = arith.constant 1 : i32
    %69 = vector.broadcast %c1_i32_30 : i32 to vector<3x7xi32>
    %70 = arith.addi %68, %69 : vector<3x7xi32>
    %71 = arith.cmpi eq, %65, %70 : vector<3x7xi32>
    %72 = arith.extui %71 : vector<3x7xi1> to vector<3x7xi32>
    %73 = arith.sitofp %72 : vector<3x7xi32> to vector<3x7xf32>
    %cst_31 = arith.constant dense<0.000000e+00> : vector<3x56xf32>
    %74 = tpu.matmul %73, %49, %cst_31 {dimension_numbers = #tpu.dot_dimension_numbers<[1], [0], [0], [1], [0, 0, 1, 1], [], []>} : vector<3x7xf32>, vector<7x56xf32>, vector<3x56xf32> -> vector<3x56xf32>
    %c1_32 = arith.constant 1 : index
    %c0_33 = arith.constant 0 : index
    %c0_34 = arith.constant 0 : index
    %75 = vector.load %arg4[%c1_32, %c0_33, %c0_34] : memref<3x56x48xf32, #tpu.memory_space<vmem>>, vector<1x56x48xf32>
    %76 = vector.shape_cast %75 : vector<1x56x48xf32> to vector<56x48xf32>
    %cst_35 = arith.constant dense<0.000000e+00> : vector<3x48xf32>
    %77 = tpu.matmul %74, %76, %cst_35 {dimension_numbers = #tpu.dot_dimension_numbers<[1], [0], [0], [1], [0, 0, 1, 1], [], []>} : vector<3x56xf32>, vector<56x48xf32>, vector<3x48xf32> -> vector<3x48xf32>
    %78 = arith.addf %64, %77 : vector<3x48xf32>
    %79 = tpu.iota {dimensions = array<i32: 1>} : vector<3x7xi32>
    %80 = tpu.iota {dimensions = array<i32: 0>} : vector<3x7xi32>
    %c2_i32_36 = arith.constant 2 : i32
    %81 = vector.broadcast %c2_i32_36 : i32 to vector<3x7xi32>
    %82 = arith.muli %80, %81 : vector<3x7xi32>
    %c2_i32_37 = arith.constant 2 : i32
    %83 = vector.broadcast %c2_i32_37 : i32 to vector<3x7xi32>
    %84 = arith.addi %82, %83 : vector<3x7xi32>
    %85 = arith.cmpi eq, %79, %84 : vector<3x7xi32>
    %86 = arith.extui %85 : vector<3x7xi1> to vector<3x7xi32>
    %87 = arith.sitofp %86 : vector<3x7xi32> to vector<3x7xf32>
    %cst_38 = arith.constant dense<0.000000e+00> : vector<3x56xf32>
    %88 = tpu.matmul %87, %49, %cst_38 {dimension_numbers = #tpu.dot_dimension_numbers<[1], [0], [0], [1], [0, 0, 1, 1], [], []>} : vector<3x7xf32>, vector<7x56xf32>, vector<3x56xf32> -> vector<3x56xf32>
    %c2_39 = arith.constant 2 : index
    %c0_40 = arith.constant 0 : index
    %c0_41 = arith.constant 0 : index
    %89 = vector.load %arg4[%c2_39, %c0_40, %c0_41] : memref<3x56x48xf32, #tpu.memory_space<vmem>>, vector<1x56x48xf32>
    %90 = vector.shape_cast %89 : vector<1x56x48xf32> to vector<56x48xf32>
    %cst_42 = arith.constant dense<0.000000e+00> : vector<3x48xf32>
    %91 = tpu.matmul %88, %90, %cst_42 {dimension_numbers = #tpu.dot_dimension_numbers<[1], [0], [0], [1], [0, 0, 1, 1], [], []>} : vector<3x56xf32>, vector<56x48xf32>, vector<3x48xf32> -> vector<3x48xf32>
    %92 = arith.addf %78, %91 : vector<3x48xf32>
    %c0_43 = arith.constant 0 : index
    %c0_44 = arith.constant 0 : index
    %93 = vector.load %arg5[%c0_43, %c0_44] : memref<1x48xf32, #tpu.memory_space<vmem>>, vector<1x48xf32>
    %94 = vector.broadcast %93 : vector<1x48xf32> to vector<3x48xf32>
    %95 = arith.addf %92, %94 : vector<3x48xf32>
    %cst_45 = arith.constant 0.000000e+00 : f32
    %96 = vector.broadcast %cst_45 : f32 to vector<3x48xf32>
    %97 = arith.maximumf %95, %96 : vector<3x48xf32>
    %98 = vector.shape_cast %97 : vector<3x48xf32> to vector<1x3x48xf32>
    %c0_46 = arith.constant 0 : index
    %c0_47 = arith.constant 0 : index
    %c0_48 = arith.constant 0 : index
    %99 = vector.load %arg6[%c0_46, %c0_47, %c0_48] : memref<1x3x48xf32, #tpu.memory_space<vmem>>, vector<1x3x48xf32>
    tpu.vector_store %arg6[%c0_46, %c0_47, %c0_48], %98 {strides = array<i32>} : memref<1x3x48xf32, #tpu.memory_space<vmem>>, vector<1x3x48xf32>,
    return
  }
  func.func @transform_0(%arg0: i32) -> (i32, i32, i32) {
    %c0_i32 = arith.constant 0 : i32
    %c0_i32_0 = arith.constant 0 : i32
    %c0_i32_1 = arith.constant 0 : i32
    return %arg0, %c0_i32, %c0_i32_0 : i32, i32, i32
  }
  func.func @transform_1(%arg0: i32) -> (i32, i32, i32) {
    %c0_i32 = arith.constant 0 : i32
    %c0_i32_0 = arith.constant 0 : i32
    %c0_i32_1 = arith.constant 0 : i32
    %c0_i32_2 = arith.constant 0 : i32
    return %c0_i32, %c0_i32_0, %c0_i32_1 : i32, i32, i32
  }
  func.func @transform_2(%arg0: i32) -> (i32, i32) {
    %c0_i32 = arith.constant 0 : i32
    %c0_i32_0 = arith.constant 0 : i32
    %c0_i32_1 = arith.constant 0 : i32
    return %c0_i32, %c0_i32_0 : i32, i32
  }
  func.func @transform_3(%arg0: i32) -> (i32, i32, i32) {
    %c0_i32 = arith.constant 0 : i32
    %c0_i32_0 = arith.constant 0 : i32
    %c0_i32_1 = arith.constant 0 : i32
    %c0_i32_2 = arith.constant 0 : i32
    return %c0_i32, %c0_i32_0, %c0_i32_1 : i32, i32, i32
  }
  func.func @transform_4(%arg0: i32) -> (i32, i32) {
    %c0_i32 = arith.constant 0 : i32
    %c0_i32_0 = arith.constant 0 : i32
    %c0_i32_1 = arith.constant 0 : i32
    return %c0_i32, %c0_i32_0 : i32, i32
  }
  func.func @transform_5(%arg0: i32) -> (i32, i32, i32) {
    %c0_i32 = arith.constant 0 : i32
    %c0_i32_0 = arith.constant 0 : i32
    %c0_i32_1 = arith.constant 0 : i32
    return %arg0, %c0_i32, %c0_i32_0 : i32, i32, i32
  }
}

</mosaic_0001>

<llo_original>
// kernel: conv_forward_fused.1
$region0: #{conv_forward_fused.1}
  #allocation0 [shape = 'u32[]', space=smem, size = 0x4, offset = 0x4, fixed_abs, tag = 'smem constant byte address 0x4 - core index']
  #allocation1 [shape = 'u32[144,128]{1,0:T(1,128)}', space=vmem, size = 0x12000, scoped, tag = 'internal scratch']
  %s0 = inlined_call_operand.vmem [shape: f32[2,16,64], index: 0, kind: input, shape index: {}]
  %s1 = inlined_call_operand.vmem [shape: f32[3,64,56], index: 1, kind: input, shape index: {}]
  %s2 = inlined_call_operand.vmem [shape: f32[1,56], index: 2, kind: input, shape index: {}]
  %s3 = inlined_call_operand.vmem [shape: f32[3,56,48], index: 3, kind: input, shape index: {}]
  %s4 = inlined_call_operand.vmem [shape: f32[1,48], index: 4, kind: input, shape index: {}]
  %s5 = inlined_call_operand.vmem [shape: f32[2,3,48], index: 5, kind: output, shape index: {}]
  %s6 = sld [smem:[#allocation0]]
  $region53: #{conv_forward_fused.1} parent=0
    _
  %s8 = ssub.s32 1, %s6
  %s9 = scalar_select 0, %s8, %s6
  loop: start=0, step=1, limit=4
  $region2: #{conv_forward_fused.1} parent=0 // loop_pre_header
    _
  $region3: #{conv_forward_fused.1} parent=0 // loop_header
    %s11 = sphi 0, %s15
    %p12 = scmp.ge.s32.totalorder %s11, 4
    %s21 = sphi 0, %s23
    %s24 = sphi 0, %s21
    %s25 = sphi 0, %s24
    %s41 = sphi 0, %s25
    %s45 = sphi 0, %s45
    %s47 = sphi 0, %s45
    %s48 = sphi 0, %s47
    %s62 = sphi 0, %s48
    %s66 = sphi 0, %s66
    %s68 = sphi 0, %s66
    %s69 = sphi 0, %s68
    %s83 = sphi 0, %s69
    %s87 = sphi 0, %s87
    %s89 = sphi 0, %s87
    %s90 = sphi 0, %s89
    %s104 = sphi 0, %s90
    %s108 = sphi 0, %s108
    %s110 = sphi 0, %s108
    %s111 = sphi 0, %s110
    %s125 = sphi 0, %s111
    %s131 = sphi 0, %s133
    %s134 = sphi 0, %s131
    %s135 = sphi 0, %s134
    %s151 = sphi 0, %s135
  $region4: #{conv_forward_fused.1} parent=0 // loop_header_branch
    %14 = sbr.rel (%p12) target = $region8
  $region5: #{conv_forward_fused.1} parent=0 // loop_body
    %s16 = ssub.s32 %s11, 1
    %s17 = ssub.s32 %s11, 2
    %s18 = sadd.s32 %s11, 1
    %s19 = ssub.s32 %s11, %s18
    %p20 = scmp.eq.s32.totalorder %s19, 0
    %s22 = sadd.s32 %s21, 1
    %s23 = scalar_select %p20, %s21, %s22
    %p26 = pneg %p20
    %p27 = scmp.eq.s32.totalorder %s11, 1
    %p28 = por %p26, %p27
    %p29 = scmp.ne.s32.totalorder %s21, %s24
    %p30 = scmp.eq.s32.totalorder %s11, 0
    %p31 = por %p29, %p30
    %p32 = scmp.ne.s32.totalorder %s21, %s24
    %p33 = scmp.eq.s32.totalorder %s16, 1
    %p34 = por %p32, %p33
    %p35 = scmp.ne.s32.totalorder %s24, %s25
    %p36 = scmp.eq.s32.totalorder %s16, 0
    %p37 = por %p35, %p36
    %p38 = scmp.ne.s32.totalorder %s24, %s25
    %p39 = scmp.eq.s32.totalorder %s17, 1
    %p40 = por %p38, %p39
    %p42 = scmp.ne.s32.totalorder %s25, %s41
    %p43 = scmp.eq.s32.totalorder %s17, 0
    %p44 = por %p42, %p43
    %s46 = sadd.s32 %s45, 1
    %p49 = scmp.eq.s32.totalorder %s11, 1
    %p50 = scmp.ne.s32.totalorder %s45, %s47
    %p51 = scmp.eq.s32.totalorder %s11, 0
    %p52 = por %p50, %p51
    %p53 = scmp.ne.s32.totalorder %s45, %s47
    %p54 = scmp.eq.s32.totalorder %s16, 1
    %p55 = por %p53, %p54
    %p56 = scmp.ne.s32.totalorder %s47, %s48
    %p57 = scmp.eq.s32.totalorder %s16, 0
    %p58 = por %p56, %p57
    %p59 = scmp.ne.s32.totalorder %s47, %s48
    %p60 = scmp.eq.s32.totalorder %s17, 1
    %p61 = por %p59, %p60
    %p63 = scmp.ne.s32.totalorder %s48, %s62
    %p64 = scmp.eq.s32.totalorder %s17, 0
    %p65 = por %p63, %p64
    %s67 = sadd.s32 %s66, 1
    %p70 = scmp.eq.s32.totalorder %s11, 1
    %p71 = scmp.ne.s32.totalorder %s66, %s68
    %p72 = scmp.eq.s32.totalorder %s11, 0
    %p73 = por %p71, %p72
    %p74 = scmp.ne.s32.totalorder %s66, %s68
    %p75 = scmp.eq.s32.totalorder %s16, 1
    %p76 = por %p74, %p75
    %p77 = scmp.ne.s32.totalorder %s68, %s69
    %p78 = scmp.eq.s32.totalorder %s16, 0
    %p79 = por %p77, %p78
    %p80 = scmp.ne.s32.totalorder %s68, %s69
    %p81 = scmp.eq.s32.totalorder %s17, 1
    %p82 = por %p80, %p81
    %p84 = scmp.ne.s32.totalorder %s69, %s83
    %p85 = scmp.eq.s32.totalorder %s17, 0
    %p86 = por %p84, %p85
    %s88 = sadd.s32 %s87, 1
    %p91 = scmp.eq.s32.totalorder %s11, 1
    %p92 = scmp.ne.s32.totalorder %s87, %s89
    %p93 = scmp.eq.s32.totalorder %s11, 0
    %p94 = por %p92, %p93
    %p95 = scmp.ne.s32.totalorder %s87, %s89
    %p96 = scmp.eq.s32.totalorder %s16, 1
    %p97 = por %p95, %p96
    %p98 = scmp.ne.s32.totalorder %s89, %s90
    %p99 = scmp.eq.s32.totalorder %s16, 0
    %p100 = por %p98, %p99
    %p101 = scmp.ne.s32.totalorder %s89, %s90
    %p102 = scmp.eq.s32.totalorder %s17, 1
    %p103 = por %p101, %p102
    %p105 = scmp.ne.s32.totalorder %s90, %s104
    %p106 = scmp.eq.s32.totalorder %s17, 0
    %p107 = por %p105, %p106
    %s109 = sadd.s32 %s108, 1
    %p112 = scmp.eq.s32.totalorder %s11, 1
    %p113 = scmp.ne.s32.totalorder %s108, %s110
    %p114 = scmp.eq.s32.totalorder %s11, 0
    %p115 = por %p113, %p114
    %p116 = scmp.ne.s32.totalorder %s108, %s110
    %p117 = scmp.eq.s32.totalorder %s16, 1
    %p118 = por %p116, %p117
    %p119 = scmp.ne.s32.totalorder %s110, %s111
    %p120 = scmp.eq.s32.totalorder %s16, 0
    %p121 = por %p119, %p120
    %p122 = scmp.ne.s32.totalorder %s110, %s111
    %p123 = scmp.eq.s32.totalorder %s17, 1
    %p124 = por %p122, %p123
    %p126 = scmp.ne.s32.totalorder %s111, %s125
    %p127 = scmp.eq.s32.totalorder %s17, 0
    %p128 = por %p126, %p127
    %s129 = ssub.s32 %s11, %s18
    %p130 = scmp.eq.s32.totalorder %s129, 0
    %s132 = sadd.s32 %s131, 1
    %s133 = scalar_select %p130, %s131, %s132
    %p136 = pneg %p130
    %p137 = scmp.eq.s32.totalorder %s11, 1
    %p138 = por %p136, %p137
    %p139 = scmp.ne.s32.totalorder %s131, %s134
    %p140 = scmp.eq.s32.totalorder %s11, 0
    %p141 = por %p139, %p140
    %p142 = scmp.ne.s32.totalorder %s131, %s134
    %p143 = scmp.eq.s32.totalorder %s16, 1
    %p144 = por %p142, %p143
    %p145 = scmp.ne.s32.totalorder %s134, %s135
    %p146 = scmp.eq.s32.totalorder %s16, 0
    %p147 = por %p145, %p146
    %p148 = scmp.ne.s32.totalorder %s134, %s135
    %p149 = scmp.eq.s32.totalorder %s17, 1
    %p150 = por %p148, %p149
    %p152 = scmp.ne.s32.totalorder %s135, %s151
    %p153 = scmp.eq.s32.totalorder %s17, 0
    %p154 = por %p152, %p153
    %p155 = scmp.le.s32.totalorder 1, %s11
    %p156 = scmp.lt.s32.totalorder %s11, 3
    %p157 = pnand %p155, %p156
    %p158 = pneg %p157
    // Predicated region
    $region9: #{conv_forward_fused.1} parent=5 // pred_check
      _
    $region10: #{conv_forward_fused.1} parent=5 // pred_check_branch
      %160 = sbr.rel (%p157) target = $region12
    $region11: #{conv_forward_fused.1} parent=5 // pred_region
      %s161 = ssub.s32 %s11, 1
      // Predicated region
      $region13: #{conv_forward_fused.1} parent=11 // pred_check
        %p162 = pneg %p58
      $region14: #{conv_forward_fused.1} parent=11 // pred_check_branch
        %164 = sbr.rel (%p162) target = $region16
      $region15: #{conv_forward_fused.1} parent=11 // pred_region
        _
      $region16: #{conv_forward_fused.1} parent=11 // pred_fallthru
        _
      // Predicated region
      $region17: #{conv_forward_fused.1} parent=11 // pred_check
        %p165 = pneg %p79
      $region18: #{conv_forward_fused.1} parent=11 // pred_check_branch
        %167 = sbr.rel (%p165) target = $region20
      $region19: #{conv_forward_fused.1} parent=11 // pred_region
        _
      $region20: #{conv_forward_fused.1} parent=11 // pred_fallthru
        _
      // Predicated region
      $region21: #{conv_forward_fused.1} parent=11 // pred_check
        %p168 = pneg %p100
      $region22: #{conv_forward_fused.1} parent=11 // pred_check_branch
        %170 = sbr.rel (%p168) target = $region24
      $region23: #{conv_forward_fused.1} parent=11 // pred_region
        _
      $region24: #{conv_forward_fused.1} parent=11 // pred_fallthru
        _
      // Predicated region
      $region25: #{conv_forward_fused.1} parent=11 // pred_check
        %p171 = pneg %p121
      $region26: #{conv_forward_fused.1} parent=11 // pred_check_branch
        %173 = sbr.rel (%p171) target = $region28
      $region27: #{conv_forward_fused.1} parent=11 // pred_region
        _
      $region28: #{conv_forward_fused.1} parent=11 // pred_fallthru
        _
    $region12: #{conv_forward_fused.1} parent=5 // pred_fallthru
      _
    %p174 = scmp.lt.s32.totalorder %s11, 2
    // Predicated region
    $region29: #{conv_forward_fused.1} parent=5 // pred_check
      %p175 = pneg %p174
    $region30: #{conv_forward_fused.1} parent=5 // pred_check_branch
      %177 = sbr.rel (%p175) target = $region32
    $region31: #{conv_forward_fused.1} parent=5 // pred_region
      // Predicated region
      $region33: #{conv_forward_fused.1} parent=31 // pred_check
        %p178 = pneg %p31
      $region34: #{conv_forward_fused.1} parent=31 // pred_check_branch
        %180 = sbr.rel (%p178) target = $region36
      $region35: #{conv_forward_fused.1} parent=31 // pred_region
        %p181 = scmp.lt.s32.totalorder %s11, 1
        %s182 = scalar_select %p181, %s11, 1
        %s183 = smul.addr %s182, 2
        %s184 = smul.addr %s183, 8
        %s185 = scalar_lea.vmem %s0, %s184
      $region36: #{conv_forward_fused.1} parent=31 // pred_fallthru
        _
    $region32: #{conv_forward_fused.1} parent=5 // pred_fallthru
      _
    %p186 = scmp.le.s32.totalorder 1, %s11
    %p187 = scmp.lt.s32.totalorder %s11, 3
    %p188 = pnand %p186, %p187
    %p189 = pneg %p188
    // Predicated region
    $region37: #{conv_forward_fused.1} parent=5 // pred_check
      _
    $region38: #{conv_forward_fused.1} parent=5 // pred_check_branch
      %191 = sbr.rel (%p188) target = $region40
    $region39: #{conv_forward_fused.1} parent=5 // pred_region
      %s192 = ssub.s32 %s11, 1
      %p193 = scmp.lt.s32.totalorder %s16, 1
      %s194 = scalar_select %p193, %s16, 1
      %s195 = smul.addr %s194, 2
      %s196 = smul.addr %s195, 8
      %s197 = scalar_lea.vmem %s0, %s196
      %p198 = pneg %p37
      %p199 = pneg %p34
      %p200 = pneg %p58
      %p201 = pneg %p55
      %p202 = pneg %p79
      %p203 = pneg %p76
      %p204 = pneg %p100
      %p205 = pneg %p97
      %p206 = pneg %p121
      %p207 = pneg %p118
      %p208 = pneg %p147
      %p209 = pneg %p144
      %p210 = scmp.lt.s32.totalorder %s16, 1
      %s211 = scalar_select %p210, %s16, 1
      %s212 = smul.addr %s211, 4
      %s213 = scalar_lea.vmem %s5, %s212
      %p214 = scmp.lt.s32.totalorder %s16, 1
      %s215 = scalar_select %p214, %s16, 1
      %s216 = smul.addr %s215, 2
      %s217 = smul.addr %s216, 8
      %s218 = scalar_lea.vmem %s0, %s217
      %p219 = scmp.lt.s32.totalorder %s16, 1
      %s220 = scalar_select %p219, %s16, 1
      %s221 = smul.addr %s220, 4
      %s222 = scalar_lea.vmem %s5, %s221
      %v223 = vld [vmem:[%s218] sm:$0xff]
      %v224 = vld [vmem:[%s218 + $0x8] sm:$0xff]
      %v225 = vlaneseq
      %v226 = vand.u32 %v225, 127
      %v227 = vlaneseq
      %v228 = vshrl.u32 %v227, 7
      %v229 = vmul.u32 %v228, 2
      %vm230 = vcmp.eq.s32.totalorder %v226, %v229
      %v231 = vsel %vm230, 1, 0
      %v232 = vcvt.s32.f32 %v231
      %vm233 = vcmask 130048
      %v235 = vsel %vm233, %v232, 0
      %237 = vmatprep.subr.mxu0 0.0
      %238 = vmatpush1.msra.mxu0 %v223
      %239 = vmatprep.subr.mxu0 0.0
      %240 = vmatpush1.msra.mxu0 %v224
      %241 = vmatprep.subr.mxu0 0.0
      %242 = vmatpush1.msra.mxu0 0.0
      %243 = vmatprep.subr.mxu0 0.0
      %244 = vmatpush1.msra.mxu0 0.0
      %245 = vmatprep.subr.mxu0 0.0
      %246 = vmatpush1.msra.mxu0 0.0
      %247 = vmatprep.subr.mxu0 0.0
      %248 = vmatpush1.msra.mxu0 0.0
      %249 = vmatprep.subr.mxu0 0.0
      %250 = vmatpush1.msra.mxu0 0.0
      %251 = vmatprep.subr.mxu0 0.0
      %252 = vmatpush1.msra.mxu0 0.0
      %253 = vmatprep.subr.mxu0 0.0
      %254 = vmatpush1.msra.mxu0 0.0
      %255 = vmatprep.subr.mxu0 0.0
      %256 = vmatpush1.msra.mxu0 0.0
      %257 = vmatprep.subr.mxu0 0.0
      %258 = vmatpush1.msra.mxu0 0.0
      %259 = vmatprep.subr.mxu0 0.0
      %260 = vmatpush1.msra.mxu0 0.0
      %261 = vmatprep.subr.mxu0 0.0
      %262 = vmatpush1.msra.mxu0 0.0
      %263 = vmatprep.subr.mxu0 0.0
      %264 = vmatpush1.msra.mxu0 0.0
      %265 = vmatprep.subr.mxu0 0.0
      %266 = vmatpush1.msra.mxu0 0.0
      %267 = vmatprep.subr.mxu0 0.0
      %268 = vmatpush1.msra.mxu0 0.0
      %269 = vmatprep.subr.mxu0 0.0
      %270 = vmatpush1.msra.mxu0 0.0
      %271 = vmatprep.subr.mxu0 0.0
      %272 = vmatpush1.msra.mxu0 0.0
      %273 = vmatprep.subr.mxu0 0.0
      %274 = vmatpush1.msra.mxu0 0.0
      %275 = vmatprep.subr.mxu0 0.0
      %276 = vmatpush1.msra.mxu0 0.0
      %277 = vmatprep.subr.mxu0 0.0
      %278 = vmatpush1.msra.mxu0 0.0
      %279 = vmatprep.subr.mxu0 0.0
      %280 = vmatpush1.msra.mxu0 0.0
      %281 = vmatprep.subr.mxu0 0.0
      %282 = vmatpush1.msra.mxu0 0.0
      %283 = vmatprep.subr.mxu0 0.0
      %284 = vmatpush1.msra.mxu0 0.0
      %285 = vmatprep.subr.mxu0 0.0
      %286 = vmatpush1.msra.mxu0 0.0
      %287 = vmatprep.subr.mxu0 0.0
      %288 = vmatpush1.msra.mxu0 0.0
      %289 = vmatprep.subr.mxu0 0.0
      %290 = vmatpush1.msra.mxu0 0.0
      %291 = vmatprep.subr.mxu0 0.0
      %292 = vmatpush1.msra.mxu0 0.0
      %293 = vmatprep.subr.mxu0 0.0
      %294 = vmatpush1.msra.mxu0 0.0
      %295 = vmatprep.subr.mxu0 0.0
      %296 = vmatpush1.msra.mxu0 0.0
      %297 = vmatprep.subr.mxu0 0.0
      %298 = vmatpush1.msra.mxu0 0.0
      %299 = vmatprep.subr.mxu0 0.0
      %300 = vmatpush1.msra.mxu0 0.0
      %301 = vmatprep.mubr.f32.mxu0 0.0
      %302 = vmatmul.mubr.f32.gmra.mrb[0].mxu0 %v235
      %v303 = vpop.f32.mrb[0].mxu0
      %v304 = vadd.f32 0.0, %v303
      %v305 = vpop.f32.mrb[0].mxu0
      %306 = vdwg.mxu0
      %v307 = vld [vmem:[%s1] sm:$0xff]
      %v308 = vld [vmem:[%s1 + $0x8] sm:$0xff]
      %v309 = vld [vmem:[%s1 + $0x10] sm:$0xff]
      %v310 = vld [vmem:[%s1 + $0x18] sm:$0xff]
      %v311 = vld [vmem:[%s1 + $0x20] sm:$0xff]
      %v312 = vld [vmem:[%s1 + $0x28] sm:$0xff]
      %v313 = vld [vmem:[%s1 + $0x30] sm:$0xff]
      %v314 = vld [vmem:[%s1 + $0x38] sm:$0xff]
      %v315 = vadd.s32 %v229, 1
      %vm316 = vcmp.eq.s32.totalorder %v226, %v315
      %v317 = vsel %vm316, 1, 0
      %v318 = vcvt.s32.f32 %v317
      %v320 = vsel %vm233, %v318, 0
      %322 = vmatprep.subr.mxu0 0.0
      %323 = vmatpush1.msra.mxu0 %v223
      %324 = vmatprep.subr.mxu0 0.0
      %325 = vmatpush1.msra.mxu0 %v224
      %326 = vmatprep.subr.mxu0 0.0
      %327 = vmatpush1.msra.mxu0 0.0
      %328 = vmatprep.subr.mxu0 0.0
      %329 = vmatpush1.msra.mxu0 0.0
      %330 = vmatprep.subr.mxu0 0.0
      %331 = vmatpush1.msra.mxu0 0.0
      %332 = vmatprep.subr.mxu0 0.0
      %333 = vmatpush1.msra.mxu0 0.0
      %334 = vmatprep.subr.mxu0 0.0
      %335 = vmatpush1.msra.mxu0 0.0
      %336 = vmatprep.subr.mxu0 0.0
      %337 = vmatpush1.msra.mxu0 0.0
      %338 = vmatprep.subr.mxu0 0.0
      %339 = vmatpush1.msra.mxu0 0.0
      %340 = vmatprep.subr.mxu0 0.0
      %341 = vmatpush1.msra.mxu0 0.0
      %342 = vmatprep.subr.mxu0 0.0
      %343 = vmatpush1.msra.mxu0 0.0
      %344 = vmatprep.subr.mxu0 0.0
      %345 = vmatpush1.msra.mxu0 0.0
      %346 = vmatprep.subr.mxu0 0.0
      %347 = vmatpush1.msra.mxu0 0.0
      %348 = vmatprep.subr.mxu0 0.0
      %349 = vmatpush1.msra.mxu0 0.0
      %350 = vmatprep.subr.mxu0 0.0
      %351 = vmatpush1.msra.mxu0 0.0
      %352 = vmatprep.subr.mxu0 0.0
      %353 = vmatpush1.msra.mxu0 0.0
      %354 = vmatprep.subr.mxu0 0.0
      %355 = vmatpush1.msra.mxu0 0.0
      %356 = vmatprep.subr.mxu0 0.0
      %357 = vmatpush1.msra.mxu0 0.0
      %358 = vmatprep.subr.mxu0 0.0
      %359 = vmatpush1.msra.mxu0 0.0
      %360 = vmatprep.subr.mxu0 0.0
      %361 = vmatpush1.msra.mxu0 0.0
      %362 = vmatprep.subr.mxu0 0.0
      %363 = vmatpush1.msra.mxu0 0.0
      %364 = vmatprep.subr.mxu0 0.0
      %365 = vmatpush1.msra.mxu0 0.0
      %366 = vmatprep.subr.mxu0 0.0
      %367 = vmatpush1.msra.mxu0 0.0
      %368 = vmatprep.subr.mxu0 0.0
      %369 = vmatpush1.msra.mxu0 0.0
      %370 = vmatprep.subr.mxu0 0.0
      %371 = vmatpush1.msra.mxu0 0.0
      %372 = vmatprep.subr.mxu0 0.0
      %373 = vmatpush1.msra.mxu0 0.0
      %374 = vmatprep.subr.mxu0 0.0
      %375 = vmatpush1.msra.mxu0 0.0
      %376 = vmatprep.subr.mxu0 0.0
      %377 = vmatpush1.msra.mxu0 0.0
      %378 = vmatprep.subr.mxu0 0.0
      %379 = vmatpush1.msra.mxu0 0.0
      %380 = vmatprep.subr.mxu0 0.0
      %381 = vmatpush1.msra.mxu0 0.0
      %382 = vmatprep.subr.mxu0 0.0
      %383 = vmatpush1.msra.mxu0 0.0
      %384 = vmatprep.subr.mxu0 0.0
      %385 = vmatpush1.msra.mxu0 0.0
      %386 = vmatprep.mubr.f32.mxu0 0.0
      %387 = vmatmul.mubr.f32.gmra.mrb[0].mxu0 %v320
      %v388 = vpop.f32.mrb[0].mxu0
      %v389 = vadd.f32 0.0, %v388
      %v390 = vpop.f32.mrb[0].mxu0
      %391 = vdwg.mxu0
      %s392 = scalar_lea.vmem %s1, 64
      %v393 = vld [vmem:[%s392] sm:$0xff]
      %v394 = vld [vmem:[%s392 + $0x8] sm:$0xff]
      %v395 = vld [vmem:[%s392 + $0x10] sm:$0xff]
      %v396 = vld [vmem:[%s392 + $0x18] sm:$0xff]
      %v397 = vld [vmem:[%s392 + $0x20] sm:$0xff]
      %v398 = vld [vmem:[%s392 + $0x28] sm:$0xff]
      %v399 = vld [vmem:[%s392 + $0x30] sm:$0xff]
      %v400 = vld [vmem:[%s392 + $0x38] sm:$0xff]
      %vm401 = vcmask 523264
      %v403 = vsel %vm401, %v389, 0
      %405 = vmatprep.subr.mxu0 0.0
      %406 = vmatpush1.msra.mxu0 %v393
      %407 = vmatprep.subr.mxu0 0.0
      %408 = vmatpush1.msra.mxu0 %v394
      %409 = vmatprep.subr.mxu0 0.0
      %410 = vmatpush1.msra.mxu0 %v395
      %411 = vmatprep.subr.mxu0 0.0
      %412 = vmatpush1.msra.mxu0 %v396
      %413 = vmatprep.subr.mxu0 0.0
      %414 = vmatpush1.msra.mxu0 %v397
      %415 = vmatprep.subr.mxu0 0.0
      %416 = vmatpush1.msra.mxu0 %v398
      %417 = vmatprep.subr.mxu0 0.0
      %418 = vmatpush1.msra.mxu0 %v399
      %419 = vmatprep.subr.mxu0 0.0
      %420 = vmatpush1.msra.mxu0 %v400
      %421 = vmatprep.subr.mxu0 0.0
      %422 = vmatpush1.msra.mxu0 0.0
      %423 = vmatprep.subr.mxu0 0.0
      %424 = vmatpush1.msra.mxu0 0.0
      %425 = vmatprep.subr.mxu0 0.0
      %426 = vmatpush1.msra.mxu0 0.0
      %427 = vmatprep.subr.mxu0 0.0
      %428 = vmatpush1.msra.mxu0 0.0
      %429 = vmatprep.subr.mxu0 0.0
      %430 = vmatpush1.msra.mxu0 0.0
      %431 = vmatprep.subr.mxu0 0.0
      %432 = vmatpush1.msra.mxu0 0.0
      %433 = vmatprep.subr.mxu0 0.0
      %434 = vmatpush1.msra.mxu0 0.0
      %435 = vmatprep.subr.mxu0 0.0
      %436 = vmatpush1.msra.mxu0 0.0
      %437 = vmatprep.subr.mxu0 0.0
      %438 = vmatpush1.msra.mxu0 0.0
      %439 = vmatprep.subr.mxu0 0.0
      %440 = vmatpush1.msra.mxu0 0.0
      %441 = vmatprep.subr.mxu0 0.0
      %442 = vmatpush1.msra.mxu0 0.0
      %443 = vmatprep.subr.mxu0 0.0
      %444 = vmatpush1.msra.mxu0 0.0
      %445 = vmatprep.subr.mxu0 0.0
      %446 = vmatpush1.msra.mxu0 0.0
      %447 = vmatprep.subr.mxu0 0.0
      %448 = vmatpush1.msra.mxu0 0.0
      %449 = vmatprep.subr.mxu0 0.0
      %450 = vmatpush1.msra.mxu0 0.0
      %451 = vmatprep.subr.mxu0 0.0
      %452 = vmatpush1.msra.mxu0 0.0
      %453 = vmatprep.subr.mxu0 0.0
      %454 = vmatpush1.msra.mxu0 0.0
      %455 = vmatprep.subr.mxu0 0.0
      %456 = vmatpush1.msra.mxu0 0.0
      %457 = vmatprep.subr.mxu0 0.0
      %458 = vmatpush1.msra.mxu0 0.0
      %459 = vmatprep.subr.mxu0 0.0
      %460 = vmatpush1.msra.mxu0 0.0
      %461 = vmatprep.subr.mxu0 0.0
      %462 = vmatpush1.msra.mxu0 0.0
      %463 = vmatprep.subr.mxu0 0.0
      %464 = vmatpush1.msra.mxu0 0.0
      %465 = vmatprep.subr.mxu0 0.0
      %466 = vmatpush1.msra.mxu0 0.0
      %467 = vmatprep.subr.mxu0 0.0
      %468 = vmatpush1.msra.mxu0 0.0
      %469 = vmatprep.mubr.f32.mxu0 0.0
      %470 = vmatmul.mubr.f32.gmra.mrb[0].mxu0 %v403
      %v471 = vpop.f32.mrb[0].mxu0
      %v472 = vadd.f32 0.0, %v471
      %v473 = vpop.f32.mrb[0].mxu0
      %474 = vdwg.mxu0
      %v476 = vsel %vm401, %v304, 0
      %478 = vmatprep.subr.mxu0 0.0
      %479 = vmatpush1.msra.mxu0 %v307
      %480 = vmatprep.subr.mxu0 0.0
      %481 = vmatpush1.msra.mxu0 %v308
      %482 = vmatprep.subr.mxu0 0.0
      %483 = vmatpush1.msra.mxu0 %v309
      %484 = vmatprep.subr.mxu0 0.0
      %485 = vmatpush1.msra.mxu0 %v310
      %486 = vmatprep.subr.mxu0 0.0
      %487 = vmatpush1.msra.mxu0 %v311
      %488 = vmatprep.subr.mxu0 0.0
      %489 = vmatpush1.msra.mxu0 %v312
      %490 = vmatprep.subr.mxu0 0.0
      %491 = vmatpush1.msra.mxu0 %v313
      %492 = vmatprep.subr.mxu0 0.0
      %493 = vmatpush1.msra.mxu0 %v314
      %494 = vmatprep.subr.mxu0 0.0
      %495 = vmatpush1.msra.mxu0 0.0
      %496 = vmatprep.subr.mxu0 0.0
      %497 = vmatpush1.msra.mxu0 0.0
      %498 = vmatprep.subr.mxu0 0.0
      %499 = vmatpush1.msra.mxu0 0.0
      %500 = vmatprep.subr.mxu0 0.0
      %501 = vmatpush1.msra.mxu0 0.0
      %502 = vmatprep.subr.mxu0 0.0
      %503 = vmatpush1.msra.mxu0 0.0
      %504 = vmatprep.subr.mxu0 0.0
      %505 = vmatpush1.msra.mxu0 0.0
      %506 = vmatprep.subr.mxu0 0.0
      %507 = vmatpush1.msra.mxu0 0.0
      %508 = vmatprep.subr.mxu0 0.0
      %509 = vmatpush1.msra.mxu0 0.0
      %510 = vmatprep.subr.mxu0 0.0
      %511 = vmatpush1.msra.mxu0 0.0
      %512 = vmatprep.subr.mxu0 0.0
      %513 = vmatpush1.msra.mxu0 0.0
      %514 = vmatprep.subr.mxu0 0.0
      %515 = vmatpush1.msra.mxu0 0.0
      %516 = vmatprep.subr.mxu0 0.0
      %517 = vmatpush1.msra.mxu0 0.0
      %518 = vmatprep.subr.mxu0 0.0
      %519 = vmatpush1.msra.mxu0 0.0
      %520 = vmatprep.subr.mxu0 0.0
      %521 = vmatpush1.msra.mxu0 0.0
      %522 = vmatprep.subr.mxu0 0.0
      %523 = vmatpush1.msra.mxu0 0.0
      %524 = vmatprep.subr.mxu0 0.0
      %525 = vmatpush1.msra.mxu0 0.0
      %526 = vmatprep.subr.mxu0 0.0
      %527 = vmatpush1.msra.mxu0 0.0
      %528 = vmatprep.subr.mxu0 0.0
      %529 = vmatpush1.msra.mxu0 0.0
      %530 = vmatprep.subr.mxu0 0.0
      %531 = vmatpush1.msra.mxu0 0.0
      %532 = vmatprep.subr.mxu0 0.0
      %533 = vmatpush1.msra.mxu0 0.0
      %534 = vmatprep.subr.mxu0 0.0
      %535 = vmatpush1.msra.mxu0 0.0
      %536 = vmatprep.subr.mxu0 0.0
      %537 = vmatpush1.msra.mxu0 0.0
      %538 = vmatprep.subr.mxu0 0.0
      %539 = vmatpush1.msra.mxu0 0.0
      %540 = vmatprep.subr.mxu0 0.0
      %541 = vmatpush1.msra.mxu0 0.0
      %542 = vmatprep.mubr.f32.mxu0 0.0
      %543 = vmatmul.mubr.f32.gmra.mrb[0].mxu0 %v476
      %v544 = vpop.f32.mrb[0].mxu0
      %v545 = vadd.f32 %v472, %v544
      %v546 = vpop.f32.mrb[0].mxu0
      %547 = vdwg.mxu0
      %v548 = vadd.s32 %v229, 2
      %vm549 = vcmp.eq.s32.totalorder %v226, %v548
      %v550 = vsel %vm549, 1, 0
      %v551 = vcvt.s32.f32 %v550
      %v553 = vsel %vm233, %v551, 0
      %555 = vmatprep.subr.mxu0 0.0
      %556 = vmatpush1.msra.mxu0 %v223
      %557 = vmatprep.subr.mxu0 0.0
      %558 = vmatpush1.msra.mxu0 %v224
      %559 = vmatprep.subr.mxu0 0.0
      %560 = vmatpush1.msra.mxu0 0.0
      %561 = vmatprep.subr.mxu0 0.0
      %562 = vmatpush1.msra.mxu0 0.0
      %563 = vmatprep.subr.mxu0 0.0
      %564 = vmatpush1.msra.mxu0 0.0
      %565 = vmatprep.subr.mxu0 0.0
      %566 = vmatpush1.msra.mxu0 0.0
      %567 = vmatprep.subr.mxu0 0.0
      %568 = vmatpush1.msra.mxu0 0.0
      %569 = vmatprep.subr.mxu0 0.0
      %570 = vmatpush1.msra.mxu0 0.0
      %571 = vmatprep.subr.mxu0 0.0
      %572 = vmatpush1.msra.mxu0 0.0
      %573 = vmatprep.subr.mxu0 0.0
      %574 = vmatpush1.msra.mxu0 0.0
      %575 = vmatprep.subr.mxu0 0.0
      %576 = vmatpush1.msra.mxu0 0.0
      %577 = vmatprep.subr.mxu0 0.0
      %578 = vmatpush1.msra.mxu0 0.0
      %579 = vmatprep.subr.mxu0 0.0
      %580 = vmatpush1.msra.mxu0 0.0
      %581 = vmatprep.subr.mxu0 0.0
      %582 = vmatpush1.msra.mxu0 0.0
      %583 = vmatprep.subr.mxu0 0.0
      %584 = vmatpush1.msra.mxu0 0.0
      %585 = vmatprep.subr.mxu0 0.0
      %586 = vmatpush1.msra.mxu0 0.0
      %587 = vmatprep.subr.mxu0 0.0
      %588 = vmatpush1.msra.mxu0 0.0
      %589 = vmatprep.subr.mxu0 0.0
      %590 = vmatpush1.msra.mxu0 0.0
      %591 = vmatprep.subr.mxu0 0.0
      %592 = vmatpush1.msra.mxu0 0.0
      %593 = vmatprep.subr.mxu0 0.0
      %594 = vmatpush1.msra.mxu0 0.0
      %595 = vmatprep.subr.mxu0 0.0
      %596 = vmatpush1.msra.mxu0 0.0
      %597 = vmatprep.subr.mxu0 0.0
      %598 = vmatpush1.msra.mxu0 0.0
      %599 = vmatprep.subr.mxu0 0.0
      %600 = vmatpush1.msra.mxu0 0.0
      %601 = vmatprep.subr.mxu0 0.0
      %602 = vmatpush1.msra.mxu0 0.0
      %603 = vmatprep.subr.mxu0 0.0
      %604 = vmatpush1.msra.mxu0 0.0
      %605 = vmatprep.subr.mxu0 0.0
      %606 = vmatpush1.msra.mxu0 0.0
      %607 = vmatprep.subr.mxu0 0.0
      %608 = vmatpush1.msra.mxu0 0.0
      %609 = vmatprep.subr.mxu0 0.0
      %610 = vmatpush1.msra.mxu0 0.0
      %611 = vmatprep.subr.mxu0 0.0
      %612 = vmatpush1.msra.mxu0 0.0
      %613 = vmatprep.subr.mxu0 0.0
      %614 = vmatpush1.msra.mxu0 0.0
      %615 = vmatprep.subr.mxu0 0.0
      %616 = vmatpush1.msra.mxu0 0.0
      %617 = vmatprep.subr.mxu0 0.0
      %618 = vmatpush1.msra.mxu0 0.0
      %619 = vmatprep.mubr.f32.mxu0 0.0
      %620 = vmatmul.mubr.f32.gmra.mrb[0].mxu0 %v553
      %v621 = vpop.f32.mrb[0].mxu0
      %v622 = vadd.f32 0.0, %v621
      %v623 = vpop.f32.mrb[0].mxu0
      %624 = vdwg.mxu0
      %s625 = scalar_lea.vmem %s1, 128
      %v626 = vld [vmem:[%s625] sm:$0xff]
      %v627 = vld [vmem:[%s625 + $0x8] sm:$0xff]
      %v628 = vld [vmem:[%s625 + $0x10] sm:$0xff]
      %v629 = vld [vmem:[%s625 + $0x18] sm:$0xff]
      %v630 = vld [vmem:[%s625 + $0x20] sm:$0xff]
      %v631 = vld [vmem:[%s625 + $0x28] sm:$0xff]
      %v632 = vld [vmem:[%s625 + $0x30] sm:$0xff]
      %v633 = vld [vmem:[%s625 + $0x38] sm:$0xff]
      %v635 = vsel %vm401, %v622, 0
      %637 = vmatprep.subr.mxu0 0.0
      %638 = vmatpush1.msra.mxu0 %v626
      %639 = vmatprep.subr.mxu0 0.0
      %640 = vmatpush1.msra.mxu0 %v627
      %641 = vmatprep.subr.mxu0 0.0
      %642 = vmatpush1.msra.mxu0 %v628
      %643 = vmatprep.subr.mxu0 0.0
      %644 = vmatpush1.msra.mxu0 %v629
      %645 = vmatprep.subr.mxu0 0.0
      %646 = vmatpush1.msra.mxu0 %v630
      %647 = vmatprep.subr.mxu0 0.0
      %648 = vmatpush1.msra.mxu0 %v631
      %649 = vmatprep.subr.mxu0 0.0
      %650 = vmatpush1.msra.mxu0 %v632
      %651 = vmatprep.subr.mxu0 0.0
      %652 = vmatpush1.msra.mxu0 %v633
      %653 = vmatprep.subr.mxu0 0.0
      %654 = vmatpush1.msra.mxu0 0.0
      %655 = vmatprep.subr.mxu0 0.0
      %656 = vmatpush1.msra.mxu0 0.0
      %657 = vmatprep.subr.mxu0 0.0
      %658 = vmatpush1.msra.mxu0 0.0
      %659 = vmatprep.subr.mxu0 0.0
      %660 = vmatpush1.msra.mxu0 0.0
      %661 = vmatprep.subr.mxu0 0.0
      %662 = vmatpush1.msra.mxu0 0.0
      %663 = vmatprep.subr.mxu0 0.0
      %664 = vmatpush1.msra.mxu0 0.0
      %665 = vmatprep.subr.mxu0 0.0
      %666 = vmatpush1.msra.mxu0 0.0
      %667 = vmatprep.subr.mxu0 0.0
      %668 = vmatpush1.msra.mxu0 0.0
      %669 = vmatprep.subr.mxu0 0.0
      %670 = vmatpush1.msra.mxu0 0.0
      %671 = vmatprep.subr.mxu0 0.0
      %672 = vmatpush1.msra.mxu0 0.0
      %673 = vmatprep.subr.mxu0 0.0
      %674 = vmatpush1.msra.mxu0 0.0
      %675 = vmatprep.subr.mxu0 0.0
      %676 = vmatpush1.msra.mxu0 0.0
      %677 = vmatprep.subr.mxu0 0.0
      %678 = vmatpush1.msra.mxu0 0.0
      %679 = vmatprep.subr.mxu0 0.0
      %680 = vmatpush1.msra.mxu0 0.0
      %681 = vmatprep.subr.mxu0 0.0
      %682 = vmatpush1.msra.mxu0 0.0
      %683 = vmatprep.subr.mxu0 0.0
      %684 = vmatpush1.msra.mxu0 0.0
      %685 = vmatprep.subr.mxu0 0.0
      %686 = vmatpush1.msra.mxu0 0.0
      %687 = vmatprep.subr.mxu0 0.0
      %688 = vmatpush1.msra.mxu0 0.0
      %689 = vmatprep.subr.mxu0 0.0
      %690 = vmatpush1.msra.mxu0 0.0
      %691 = vmatprep.subr.mxu0 0.0
      %692 = vmatpush1.msra.mxu0 0.0
      %693 = vmatprep.subr.mxu0 0.0
      %694 = vmatpush1.msra.mxu0 0.0
      %695 = vmatprep.subr.mxu0 0.0
      %696 = vmatpush1.msra.mxu0 0.0
      %697 = vmatprep.subr.mxu0 0.0
      %698 = vmatpush1.msra.mxu0 0.0
      %699 = vmatprep.subr.mxu0 0.0
      %700 = vmatpush1.msra.mxu0 0.0
      %701 = vmatprep.mubr.f32.mxu0 0.0
      %702 = vmatmul.mubr.f32.gmra.mrb[0].mxu0 %v635
      %v703 = vpop.f32.mrb[0].mxu0
      %v704 = vadd.f32 0.0, %v703
      %v705 = vpop.f32.mrb[0].mxu0
      %706 = vdwg.mxu0
      %v707 = vadd.f32 %v545, %v704
      %v708 = vld [vmem:[%s2] sm:$0x1]
      %v710 = vlaneseq
      %v711 = vshrl.u32 %v710, 7
      %v712 = vsub.s32 0, %v711
      %v713 = vrot.slane %v708, %v712
      %v715 = vadd.f32 %v707, %v713
      %v716 = vmax.f32 %v715, 0.0
      %vm717 = vcmask 56320
      %v718 = vsel %vm717, %v232, 0
      %vm720 = vcmask 1046528
      %v722 = vsel %vm720, %v716, 0
      %724 = vmatprep.subr.mxu0 0.0
      %725 = vmatpush1.msra.mxu0 %v722
      %726 = vmatprep.subr.mxu0 0.0
      %727 = vmatpush1.msra.mxu0 0.0
      %728 = vmatprep.subr.mxu0 0.0
      %729 = vmatpush1.msra.mxu0 0.0
      %730 = vmatprep.subr.mxu0 0.0
      %731 = vmatpush1.msra.mxu0 0.0
      %732 = vmatprep.subr.mxu0 0.0
      %733 = vmatpush1.msra.mxu0 0.0
      %734 = vmatprep.subr.mxu0 0.0
      %735 = vmatpush1.msra.mxu0 0.0
      %736 = vmatprep.subr.mxu0 0.0
      %737 = vmatpush1.msra.mxu0 0.0
      %738 = vmatprep.subr.mxu0 0.0
      %739 = vmatpush1.msra.mxu0 0.0
      %740 = vmatprep.subr.mxu0 0.0
      %741 = vmatpush1.msra.mxu0 0.0
      %742 = vmatprep.subr.mxu0 0.0
      %743 = vmatpush1.msra.mxu0 0.0
      %744 = vmatprep.subr.mxu0 0.0
      %745 = vmatpush1.msra.mxu0 0.0
      %746 = vmatprep.subr.mxu0 0.0
      %747 = vmatpush1.msra.mxu0 0.0
      %748 = vmatprep.subr.mxu0 0.0
      %749 = vmatpush1.msra.mxu0 0.0
      %750 = vmatprep.subr.mxu0 0.0
      %751 = vmatpush1.msra.mxu0 0.0
      %752 = vmatprep.subr.mxu0 0.0
      %753 = vmatpush1.msra.mxu0 0.0
      %754 = vmatprep.subr.mxu0 0.0
      %755 = vmatpush1.msra.mxu0 0.0
      %756 = vmatprep.subr.mxu0 0.0
      %757 = vmatpush1.msra.mxu0 0.0
      %758 = vmatprep.subr.mxu0 0.0
      %759 = vmatpush1.msra.mxu0 0.0
      %760 = vmatprep.subr.mxu0 0.0
      %761 = vmatpush1.msra.mxu0 0.0
      %762 = vmatprep.subr.mxu0 0.0
      %763 = vmatpush1.msra.mxu0 0.0
      %764 = vmatprep.subr.mxu0 0.0
      %765 = vmatpush1.msra.mxu0 0.0
      %766 = vmatprep.subr.mxu0 0.0
      %767 = vmatpush1.msra.mxu0 0.0
      %768 = vmatprep.subr.mxu0 0.0
      %769 = vmatpush1.msra.mxu0 0.0
      %770 = vmatprep.subr.mxu0 0.0
      %771 = vmatpush1.msra.mxu0 0.0
      %772 = vmatprep.subr.mxu0 0.0
      %773 = vmatpush1.msra.mxu0 0.0
      %774 = vmatprep.subr.mxu0 0.0
      %775 = vmatpush1.msra.mxu0 0.0
      %776 = vmatprep.subr.mxu0 0.0
      %777 = vmatpush1.msra.mxu0 0.0
      %778 = vmatprep.subr.mxu0 0.0
      %779 = vmatpush1.msra.mxu0 0.0
      %780 = vmatprep.subr.mxu0 0.0
      %781 = vmatpush1.msra.mxu0 0.0
      %782 = vmatprep.subr.mxu0 0.0
      %783 = vmatpush1.msra.mxu0 0.0
      %784 = vmatprep.subr.mxu0 0.0
      %785 = vmatpush1.msra.mxu0 0.0
      %786 = vmatprep.subr.mxu0 0.0
      %787 = vmatpush1.msra.mxu0 0.0
      %788 = vmatprep.mubr.f32.mxu0 0.0
      %789 = vmatmul.mubr.f32.gmra.mrb[0].mxu0 %v718
      %v790 = vpop.f32.mrb[0].mxu0
      %v791 = vadd.f32 0.0, %v790
      %v792 = vpop.f32.mrb[0].mxu0
      %793 = vdwg.mxu0
      %v794 = vld [vmem:[%s3] sm:$0xff]
      %v795 = vld [vmem:[%s3 + $0x8] sm:$0xff]
      %v796 = vld [vmem:[%s3 + $0x10] sm:$0xff]
      %v797 = vld [vmem:[%s3 + $0x18] sm:$0xff]
      %v798 = vld [vmem:[%s3 + $0x20] sm:$0xff]
      %v799 = vld [vmem:[%s3 + $0x28] sm:$0xff]
      %v800 = vld [vmem:[%s3 + $0x30] sm:$0xff]
      %v801 = vsel %vm717, %v318, 0
      %803 = vmatprep.subr.mxu0 0.0
      %804 = vmatpush1.msra.mxu0 %v722
      %805 = vmatprep.subr.mxu0 0.0
      %806 = vmatpush1.msra.mxu0 0.0
      %807 = vmatprep.subr.mxu0 0.0
      %808 = vmatpush1.msra.mxu0 0.0
      %809 = vmatprep.subr.mxu0 0.0
      %810 = vmatpush1.msra.mxu0 0.0
      %811 = vmatprep.subr.mxu0 0.0
      %812 = vmatpush1.msra.mxu0 0.0
      %813 = vmatprep.subr.mxu0 0.0
      %814 = vmatpush1.msra.mxu0 0.0
      %815 = vmatprep.subr.mxu0 0.0
      %816 = vmatpush1.msra.mxu0 0.0
      %817 = vmatprep.subr.mxu0 0.0
      %818 = vmatpush1.msra.mxu0 0.0
      %819 = vmatprep.subr.mxu0 0.0
      %820 = vmatpush1.msra.mxu0 0.0
      %821 = vmatprep.subr.mxu0 0.0
      %822 = vmatpush1.msra.mxu0 0.0
      %823 = vmatprep.subr.mxu0 0.0
      %824 = vmatpush1.msra.mxu0 0.0
      %825 = vmatprep.subr.mxu0 0.0
      %826 = vmatpush1.msra.mxu0 0.0
      %827 = vmatprep.subr.mxu0 0.0
      %828 = vmatpush1.msra.mxu0 0.0
      %829 = vmatprep.subr.mxu0 0.0
      %830 = vmatpush1.msra.mxu0 0.0
      %831 = vmatprep.subr.mxu0 0.0
      %832 = vmatpush1.msra.mxu0 0.0
      %833 = vmatprep.subr.mxu0 0.0
      %834 = vmatpush1.msra.mxu0 0.0
      %835 = vmatprep.subr.mxu0 0.0
      %836 = vmatpush1.msra.mxu0 0.0
      %837 = vmatprep.subr.mxu0 0.0
      %838 = vmatpush1.msra.mxu0 0.0
      %839 = vmatprep.subr.mxu0 0.0
      %840 = vmatpush1.msra.mxu0 0.0
      %841 = vmatprep.subr.mxu0 0.0
      %842 = vmatpush1.msra.mxu0 0.0
      %843 = vmatprep.subr.mxu0 0.0
      %844 = vmatpush1.msra.mxu0 0.0
      %845 = vmatprep.subr.mxu0 0.0
      %846 = vmatpush1.msra.mxu0 0.0
      %847 = vmatprep.subr.mxu0 0.0
      %848 = vmatpush1.msra.mxu0 0.0
      %849 = vmatprep.subr.mxu0 0.0
      %850 = vmatpush1.msra.mxu0 0.0
      %851 = vmatprep.subr.mxu0 0.0
      %852 = vmatpush1.msra.mxu0 0.0
      %853 = vmatprep.subr.mxu0 0.0
      %854 = vmatpush1.msra.mxu0 0.0
      %855 = vmatprep.subr.mxu0 0.0
      %856 = vmatpush1.msra.mxu0 0.0
      %857 = vmatprep.subr.mxu0 0.0
      %858 = vmatpush1.msra.mxu0 0.0
      %859 = vmatprep.subr.mxu0 0.0
      %860 = vmatpush1.msra.mxu0 0.0
      %861 = vmatprep.subr.mxu0 0.0
      %862 = vmatpush1.msra.mxu0 0.0
      %863 = vmatprep.subr.mxu0 0.0
      %864 = vmatpush1.msra.mxu0 0.0
      %865 = vmatprep.subr.mxu0 0.0
      %866 = vmatpush1.msra.mxu0 0.0
      %867 = vmatprep.mubr.f32.mxu0 0.0
      %868 = vmatmul.mubr.f32.gmra.mrb[0].mxu0 %v801
      %v869 = vpop.f32.mrb[0].mxu0
      %v870 = vadd.f32 0.0, %v869
      %v871 = vpop.f32.mrb[0].mxu0
      %872 = vdwg.mxu0
      %s873 = scalar_lea.vmem %s3, 56
      %v874 = vld [vmem:[%s873] sm:$0xff]
      %v875 = vld [vmem:[%s873 + $0x8] sm:$0xff]
      %v876 = vld [vmem:[%s873 + $0x10] sm:$0xff]
      %v877 = vld [vmem:[%s873 + $0x18] sm:$0xff]
      %v878 = vld [vmem:[%s873 + $0x20] sm:$0xff]
      %v879 = vld [vmem:[%s873 + $0x28] sm:$0xff]
      %v880 = vld [vmem:[%s873 + $0x30] sm:$0xff]
      %vm881 = vcmask 457728
      %v883 = vsel %vm881, %v870, 0
      %885 = vmatprep.subr.mxu0 0.0
      %886 = vmatpush1.msra.mxu0 %v874
      %887 = vmatprep.subr.mxu0 0.0
      %888 = vmatpush1.msra.mxu0 %v875
      %889 = vmatprep.subr.mxu0 0.0
      %890 = vmatpush1.msra.mxu0 %v876
      %891 = vmatprep.subr.mxu0 0.0
      %892 = vmatpush1.msra.mxu0 %v877
      %893 = vmatprep.subr.mxu0 0.0
      %894 = vmatpush1.msra.mxu0 %v878
      %895 = vmatprep.subr.mxu0 0.0
      %896 = vmatpush1.msra.mxu0 %v879
      %897 = vmatprep.subr.mxu0 0.0
      %898 = vmatpush1.msra.mxu0 %v880
      %899 = vmatprep.subr.mxu0 0.0
      %900 = vmatpush1.msra.mxu0 0.0
      %901 = vmatprep.subr.mxu0 0.0
      %902 = vmatpush1.msra.mxu0 0.0
      %903 = vmatprep.subr.mxu0 0.0
      %904 = vmatpush1.msra.mxu0 0.0
      %905 = vmatprep.subr.mxu0 0.0
      %906 = vmatpush1.msra.mxu0 0.0
      %907 = vmatprep.subr.mxu0 0.0
      %908 = vmatpush1.msra.mxu0 0.0
      %909 = vmatprep.subr.mxu0 0.0
      %910 = vmatpush1.msra.mxu0 0.0
      %911 = vmatprep.subr.mxu0 0.0
      %912 = vmatpush1.msra.mxu0 0.0
      %913 = vmatprep.subr.mxu0 0.0
      %914 = vmatpush1.msra.mxu0 0.0
      %915 = vmatprep.subr.mxu0 0.0
      %916 = vmatpush1.msra.mxu0 0.0
      %917 = vmatprep.subr.mxu0 0.0
      %918 = vmatpush1.msra.mxu0 0.0
      %919 = vmatprep.subr.mxu0 0.0
      %920 = vmatpush1.msra.mxu0 0.0
      %921 = vmatprep.subr.mxu0 0.0
      %922 = vmatpush1.msra.mxu0 0.0
      %923 = vmatprep.subr.mxu0 0.0
      %924 = vmatpush1.msra.mxu0 0.0
      %925 = vmatprep.subr.mxu0 0.0
      %926 = vmatpush1.msra.mxu0 0.0
      %927 = vmatprep.subr.mxu0 0.0
      %928 = vmatpush1.msra.mxu0 0.0
      %929 = vmatprep.subr.mxu0 0.0
      %930 = vmatpush1.msra.mxu0 0.0
      %931 = vmatprep.subr.mxu0 0.0
      %932 = vmatpush1.msra.mxu0 0.0
      %933 = vmatprep.subr.mxu0 0.0
      %934 = vmatpush1.msra.mxu0 0.0
      %935 = vmatprep.subr.mxu0 0.0
      %936 = vmatpush1.msra.mxu0 0.0
      %937 = vmatprep.subr.mxu0 0.0
      %938 = vmatpush1.msra.mxu0 0.0
      %939 = vmatprep.subr.mxu0 0.0
      %940 = vmatpush1.msra.mxu0 0.0
      %941 = vmatprep.subr.mxu0 0.0
      %942 = vmatpush1.msra.mxu0 0.0
      %943 = vmatprep.subr.mxu0 0.0
      %944 = vmatpush1.msra.mxu0 0.0
      %945 = vmatprep.subr.mxu0 0.0
      %946 = vmatpush1.msra.mxu0 0.0
      %947 = vmatprep.subr.mxu0 0.0
      %948 = vmatpush1.msra.mxu0 0.0
      %949 = vmatprep.mubr.f32.mxu0 0.0
      %950 = vmatmul.mubr.f32.gmra.mrb[0].mxu0 %v883
      %v951 = vpop.f32.mrb[0].mxu0
      %v952 = vadd.f32 0.0, %v951
      %v953 = vpop.f32.mrb[0].mxu0
      %954 = vdwg.mxu0
      %v956 = vsel %vm881, %v791, 0
      %958 = vmatprep.subr.mxu0 0.0
      %959 = vmatpush1.msra.mxu0 %v794
      %960 = vmatprep.subr.mxu0 0.0
      %961 = vmatpush1.msra.mxu0 %v795
      %962 = vmatprep.subr.mxu0 0.0
      %963 = vmatpush1.msra.mxu0 %v796
      %964 = vmatprep.subr.mxu0 0.0
      %965 = vmatpush1.msra.mxu0 %v797
      %966 = vmatprep.subr.mxu0 0.0
      %967 = vmatpush1.msra.mxu0 %v798
      %968 = vmatprep.subr.mxu0 0.0
      %969 = vmatpush1.msra.mxu0 %v799
      %970 = vmatprep.subr.mxu0 0.0
      %971 = vmatpush1.msra.mxu0 %v800
      %972 = vmatprep.subr.mxu0 0.0
      %973 = vmatpush1.msra.mxu0 0.0
      %974 = vmatprep.subr.mxu0 0.0
      %975 = vmatpush1.msra.mxu0 0.0
      %976 = vmatprep.subr.mxu0 0.0
      %977 = vmatpush1.msra.mxu0 0.0
      %978 = vmatprep.subr.mxu0 0.0
      %979 = vmatpush1.msra.mxu0 0.0
      %980 = vmatprep.subr.mxu0 0.0
      %981 = vmatpush1.msra.mxu0 0.0
      %982 = vmatprep.subr.mxu0 0.0
      %983 = vmatpush1.msra.mxu0 0.0
      %984 = vmatprep.subr.mxu0 0.0
      %985 = vmatpush1.msra.mxu0 0.0
      %986 = vmatprep.subr.mxu0 0.0
      %987 = vmatpush1.msra.mxu0 0.0
      %988 = vmatprep.subr.mxu0 0.0
      %989 = vmatpush1.msra.mxu0 0.0
      %990 = vmatprep.subr.mxu0 0.0
      %991 = vmatpush1.msra.mxu0 0.0
      %992 = vmatprep.subr.mxu0 0.0
      %993 = vmatpush1.msra.mxu0 0.0
      %994 = vmatprep.subr.mxu0 0.0
      %995 = vmatpush1.msra.mxu0 0.0
      %996 = vmatprep.subr.mxu0 0.0
      %997 = vmatpush1.msra.mxu0 0.0
      %998 = vmatprep.subr.mxu0 0.0
      %999 = vmatpush1.msra.mxu0 0.0
      %1000 = vmatprep.subr.mxu0 0.0
      %1001 = vmatpush1.msra.mxu0 0.0
      %1002 = vmatprep.subr.mxu0 0.0
      %1003 = vmatpush1.msra.mxu0 0.0
      %1004 = vmatprep.subr.mxu0 0.0
      %1005 = vmatpush1.msra.mxu0 0.0
      %1006 = vmatprep.subr.mxu0 0.0
      %1007 = vmatpush1.msra.mxu0 0.0
      %1008 = vmatprep.subr.mxu0 0.0
      %1009 = vmatpush1.msra.mxu0 0.0
      %1010 = vmatprep.subr.mxu0 0.0
      %1011 = vmatpush1.msra.mxu0 0.0
      %1012 = vmatprep.subr.mxu0 0.0
      %1013 = vmatpush1.msra.mxu0 0.0
      %1014 = vmatprep.subr.mxu0 0.0
      %1015 = vmatpush1.msra.mxu0 0.0
      %1016 = vmatprep.subr.mxu0 0.0
      %1017 = vmatpush1.msra.mxu0 0.0
      %1018 = vmatprep.subr.mxu0 0.0
      %1019 = vmatpush1.msra.mxu0 0.0
      %1020 = vmatprep.subr.mxu0 0.0
      %1021 = vmatpush1.msra.mxu0 0.0
      %1022 = vmatprep.mubr.f32.mxu0 0.0
      %1023 = vmatmul.mubr.f32.gmra.mrb[0].mxu0 %v956
      %v1024 = vpop.f32.mrb[0].mxu0
      %v1025 = vadd.f32 %v952, %v1024
      %v1026 = vpop.f32.mrb[0].mxu0
      %1027 = vdwg.mxu0
      %v1028 = vsel %vm717, %v551, 0
      %1030 = vmatprep.subr.mxu0 0.0
      %1031 = vmatpush1.msra.mxu0 %v722
      %1032 = vmatprep.subr.mxu0 0.0
      %1033 = vmatpush1.msra.mxu0 0.0
      %1034 = vmatprep.subr.mxu0 0.0
      %1035 = vmatpush1.msra.mxu0 0.0
      %1036 = vmatprep.subr.mxu0 0.0
      %1037 = vmatpush1.msra.mxu0 0.0
      %1038 = vmatprep.subr.mxu0 0.0
      %1039 = vmatpush1.msra.mxu0 0.0
      %1040 = vmatprep.subr.mxu0 0.0
      %1041 = vmatpush1.msra.mxu0 0.0
      %1042 = vmatprep.subr.mxu0 0.0
      %1043 = vmatpush1.msra.mxu0 0.0
      %1044 = vmatprep.subr.mxu0 0.0
      %1045 = vmatpush1.msra.mxu0 0.0
      %1046 = vmatprep.subr.mxu0 0.0
      %1047 = vmatpush1.msra.mxu0 0.0
      %1048 = vmatprep.subr.mxu0 0.0
      %1049 = vmatpush1.msra.mxu0 0.0
      %1050 = vmatprep.subr.mxu0 0.0
      %1051 = vmatpush1.msra.mxu0 0.0
      %1052 = vmatprep.subr.mxu0 0.0
      %1053 = vmatpush1.msra.mxu0 0.0
      %1054 = vmatprep.subr.mxu0 0.0
      %1055 = vmatpush1.msra.mxu0 0.0
      %1056 = vmatprep.subr.mxu0 0.0
      %1057 = vmatpush1.msra.mxu0 0.0
      %1058 = vmatprep.subr.mxu0 0.0
      %1059 = vmatpush1.msra.mxu0 0.0
      %1060 = vmatprep.subr.mxu0 0.0
      %1061 = vmatpush1.msra.mxu0 0.0
      %1062 = vmatprep.subr.mxu0 0.0
      %1063 = vmatpush1.msra.mxu0 0.0
      %1064 = vmatprep.subr.mxu0 0.0
      %1065 = vmatpush1.msra.mxu0 0.0
      %1066 = vmatprep.subr.mxu0 0.0
      %1067 = vmatpush1.msra.mxu0 0.0
      %1068 = vmatprep.subr.mxu0 0.0
      %1069 = vmatpush1.msra.mxu0 0.0
      %1070 = vmatprep.subr.mxu0 0.0
      %1071 = vmatpush1.msra.mxu0 0.0
      %1072 = vmatprep.subr.mxu0 0.0
      %1073 = vmatpush1.msra.mxu0 0.0
      %1074 = vmatprep.subr.mxu0 0.0
      %1075 = vmatpush1.msra.mxu0 0.0
      %1076 = vmatprep.subr.mxu0 0.0
      %1077 = vmatpush1.msra.mxu0 0.0
      %1078 = vmatprep.subr.mxu0 0.0
      %1079 = vmatpush1.msra.mxu0 0.0
      %1080 = vmatprep.subr.mxu0 0.0
      %1081 = vmatpush1.msra.mxu0 0.0
      %1082 = vmatprep.subr.mxu0 0.0
      %1083 = vmatpush1.msra.mxu0 0.0
      %1084 = vmatprep.subr.mxu0 0.0
      %1085 = vmatpush1.msra.mxu0 0.0
      %1086 = vmatprep.subr.mxu0 0.0
      %1087 = vmatpush1.msra.mxu0 0.0
      %1088 = vmatprep.subr.mxu0 0.0
      %1089 = vmatpush1.msra.mxu0 0.0
      %1090 = vmatprep.subr.mxu0 0.0
      %1091 = vmatpush1.msra.mxu0 0.0
      %1092 = vmatprep.subr.mxu0 0.0
      %1093 = vmatpush1.msra.mxu0 0.0
      %1094 = vmatprep.mubr.f32.mxu0 0.0
      %1095 = vmatmul.mubr.f32.gmra.mrb[0].mxu0 %v1028
      %v1096 = vpop.f32.mrb[0].mxu0
      %v1097 = vadd.f32 0.0, %v1096
      %v1098 = vpop.f32.mrb[0].mxu0
      %1099 = vdwg.mxu0
      %s1100 = scalar_lea.vmem %s3, 112
      %v1101 = vld [vmem:[%s1100] sm:$0xff]
      %v1102 = vld [vmem:[%s1100 + $0x8] sm:$0xff]
      %v1103 = vld [vmem:[%s1100 + $0x10] sm:$0xff]
      %v1104 = vld [vmem:[%s1100 + $0x18] sm:$0xff]
      %v1105 = vld [vmem:[%s1100 + $0x20] sm:$0xff]
      %v1106 = vld [vmem:[%s1100 + $0x28] sm:$0xff]
      %v1107 = vld [vmem:[%s1100 + $0x30] sm:$0xff]
      %v1109 = vsel %vm881, %v1097, 0
      %1111 = vmatprep.subr.mxu0 0.0
      %1112 = vmatpush1.msra.mxu0 %v1101
      %1113 = vmatprep.subr.mxu0 0.0
      %1114 = vmatpush1.msra.mxu0 %v1102
      %1115 = vmatprep.subr.mxu0 0.0
      %1116 = vmatpush1.msra.mxu0 %v1103
      %1117 = vmatprep.subr.mxu0 0.0
      %1118 = vmatpush1.msra.mxu0 %v1104
      %1119 = vmatprep.subr.mxu0 0.0
      %1120 = vmatpush1.msra.mxu0 %v1105
      %1121 = vmatprep.subr.mxu0 0.0
      %1122 = vmatpush1.msra.mxu0 %v1106
      %1123 = vmatprep.subr.mxu0 0.0
      %1124 = vmatpush1.msra.mxu0 %v1107
      %1125 = vmatprep.subr.mxu0 0.0
      %1126 = vmatpush1.msra.mxu0 0.0
      %1127 = vmatprep.subr.mxu0 0.0
      %1128 = vmatpush1.msra.mxu0 0.0
      %1129 = vmatprep.subr.mxu0 0.0
      %1130 = vmatpush1.msra.mxu0 0.0
      %1131 = vmatprep.subr.mxu0 0.0
      %1132 = vmatpush1.msra.mxu0 0.0
      %1133 = vmatprep.subr.mxu0 0.0
      %1134 = vmatpush1.msra.mxu0 0.0
      %1135 = vmatprep.subr.mxu0 0.0
      %1136 = vmatpush1.msra.mxu0 0.0
      %1137 = vmatprep.subr.mxu0 0.0
      %1138 = vmatpush1.msra.mxu0 0.0
      %1139 = vmatprep.subr.mxu0 0.0
      %1140 = vmatpush1.msra.mxu0 0.0
      %1141 = vmatprep.subr.mxu0 0.0
      %1142 = vmatpush1.msra.mxu0 0.0
      %1143 = vmatprep.subr.mxu0 0.0
      %1144 = vmatpush1.msra.mxu0 0.0
      %1145 = vmatprep.subr.mxu0 0.0
      %1146 = vmatpush1.msra.mxu0 0.0
      %1147 = vmatprep.subr.mxu0 0.0
      %1148 = vmatpush1.msra.mxu0 0.0
      %1149 = vmatprep.subr.mxu0 0.0
      %1150 = vmatpush1.msra.mxu0 0.0
      %1151 = vmatprep.subr.mxu0 0.0
      %1152 = vmatpush1.msra.mxu0 0.0
      %1153 = vmatprep.subr.mxu0 0.0
      %1154 = vmatpush1.msra.mxu0 0.0
      %1155 = vmatprep.subr.mxu0 0.0
      %1156 = vmatpush1.msra.mxu0 0.0
      %1157 = vmatprep.subr.mxu0 0.0
      %1158 = vmatpush1.msra.mxu0 0.0
      %1159 = vmatprep.subr.mxu0 0.0
      %1160 = vmatpush1.msra.mxu0 0.0
      %1161 = vmatprep.subr.mxu0 0.0
      %1162 = vmatpush1.msra.mxu0 0.0
      %1163 = vmatprep.subr.mxu0 0.0
      %1164 = vmatpush1.msra.mxu0 0.0
      %1165 = vmatprep.subr.mxu0 0.0
      %1166 = vmatpush1.msra.mxu0 0.0
      %1167 = vmatprep.subr.mxu0 0.0
      %1168 = vmatpush1.msra.mxu0 0.0
      %1169 = vmatprep.subr.mxu0 0.0
      %1170 = vmatpush1.msra.mxu0 0.0
      %1171 = vmatprep.subr.mxu0 0.0
      %1172 = vmatpush1.msra.mxu0 0.0
      %1173 = vmatprep.subr.mxu0 0.0
      %1174 = vmatpush1.msra.mxu0 0.0
      %1175 = vmatprep.mubr.f32.mxu0 0.0
      %1176 = vmatmul.mubr.f32.gmra.mrb[0].mxu0 %v1109
      %v1177 = vpop.f32.mrb[0].mxu0
      %v1178 = vadd.f32 0.0, %v1177
      %v1179 = vpop.f32.mrb[0].mxu0
      %1180 = vdwg.mxu0
      %v1181 = vadd.f32 %v1025, %v1178
      %v1182 = vld [vmem:[%s4] sm:$0x1]
      %v1184 = vlaneseq
      %v1185 = vshrl.u32 %v1184, 7
      %v1186 = vsub.s32 0, %v1185
      %v1187 = vrot.slane %v1182, %v1186
      %v1189 = vadd.f32 %v1181, %v1187
      %v1190 = vmax.f32 %v1189, 0.0
      %vm1191 = vcmask 387072
      %1192 = vst.msk [vmem:[%s222] sm:$0x7] %vm1191, %v1190
      %p1193 = scmp.lt.s32.totalorder %s16, 1
      %s1194 = scalar_select %p1193, %s16, 1
      %s1195 = smul.addr %s1194, 4
      %s1196 = scalar_lea.vmem %s5, %s1195
      // Predicated region
      $region41: #{conv_forward_fused.1} parent=39 // pred_check
        %p1197 = pneg %p144
      $region42: #{conv_forward_fused.1} parent=39 // pred_check_branch
        %1199 = sbr.rel (%p1197) target = $region44
      $region43: #{conv_forward_fused.1} parent=39 // pred_region
        _
      $region44: #{conv_forward_fused.1} parent=39 // pred_fallthru
        _
    $region40: #{conv_forward_fused.1} parent=5 // pred_fallthru
      _
    %p1200 = scmp.le.s32.totalorder 2, %s11
    // Predicated region
    $region45: #{conv_forward_fused.1} parent=5 // pred_check
      %p1201 = pneg %p1200
    $region46: #{conv_forward_fused.1} parent=5 // pred_check_branch
      %1203 = sbr.rel (%p1201) target = $region48
    $region47: #{conv_forward_fused.1} parent=5 // pred_region
      %s1204 = ssub.s32 %s11, 2
      // Predicated region
      $region49: #{conv_forward_fused.1} parent=47 // pred_check
        %p1205 = pneg %p150
      $region50: #{conv_forward_fused.1} parent=47 // pred_check_branch
        %1207 = sbr.rel (%p1205) target = $region52
      $region51: #{conv_forward_fused.1} parent=47 // pred_region
        %p1208 = scmp.lt.s32.totalorder %s17, 1
        %s1209 = scalar_select %p1208, %s17, 1
        %s1210 = smul.addr %s1209, 4
        %s1211 = scalar_lea.vmem %s5, %s1210
      $region52: #{conv_forward_fused.1} parent=47 // pred_fallthru
        _
    $region48: #{conv_forward_fused.1} parent=5 // pred_fallthru
      _
  $region6: #{conv_forward_fused.1} parent=0 // loop_footer
    %s15 = sadd.s32 1, %s11
  $region7: #{conv_forward_fused.1} parent=0 // loop_footer_branch
    %10 = sbr.rel target = $region3
  $region8: #{conv_forward_fused.1} parent=0 // loop_exit
    _

</llo_original>
